<compile_context>
chip_gen: v5e
topology: v5e:2x2
jax: 0.10.0
libtpu: 0.0.40
codegen_flags: <defaults>
</compile_context>

<pallas_src>
import math
from functools import partial

import jax
import jax.numpy as jnp
from jax.experimental import pallas as pl
from jax.experimental.pallas import tpu as pltpu


# ---------------------------------------------------------------------------
# Pallas kernel: one fused multiply-add on the interleaved spectrum.
# ---------------------------------------------------------------------------
def _fourier_deconv_kernel(mix, x_ref, inv_ref, bias_ref, o_ref):
    # x_ref    : (Bblk, Cin, T)   interleaved [re, im] f32 view of the spectrum
    # inv_ref  : (Cout, T)        interleaved 1/(weight+eps)  ([i, i] per pair)
    # bias_ref : (Cout, T)        interleaved bias plane      ([b, 0] per pair)
    # o_ref    : (Bblk, Cout, T)  interleaved [re, im] output
    x = x_ref[...]
    if mix:  # static Python flag: conv with all-ones (Cout,Cin,1,1) == sum over Cin
        # complex sum over channels == elementwise sum of the interleaved planes
        x = jnp.sum(x, axis=1, keepdims=True)            # (Bblk, 1, T)
    o_ref[...] = x * inv_ref[...][None] + bias_ref[...][None]


# ---------------------------------------------------------------------------
# Wrapper helpers.
# ---------------------------------------------------------------------------
def _to_interleaved_f32(xc):
    """complex64 (..., W) -> f32 (..., 2W), memory order [re0, im0, re1, im1, ...].
    One fused XLA pass (no separate real/imag HBM round-trips)."""
    r = jnp.real(xc).astype(jnp.float32)
    i = jnp.imag(xc).astype(jnp.float32)
    return jnp.stack([r, i], axis=-1).reshape(*xc.shape[:-1], 2 * xc.shape[-1])


def _from_interleaved_f32(xf):
    """f32 (..., 2W) interleaved -> complex64 (..., W). One fused XLA pass."""
    x2 = xf.reshape(*xf.shape[:-1], xf.shape[-1] // 2, 2)
    return jax.lax.complex(x2[..., 0], x2[..., 1])


def _vmem_limit_bytes():
    """Generation-aware scoped-VMEM limit: <= half of physical VMEM, <= 64 MiB.
    v5e/v6e (128 MiB phys) -> 64 MiB; v7x (64 MiB/TC) -> 32 MiB."""
    cap = 64 * 1024 * 1024
    try:
        info = pltpu.get_tpu_info()
        cap = int(getattr(info, "vmem_capacity_bytes", cap))
    except Exception:
        pass
    return int(min(cap // 2, 64 * 1024 * 1024))


def fourier_deconv2d(x, weight, bias=None, *, eps=1e-5, padding=None,
                     pre_fft=True, post_ifft=False):
    """x: (B, Cin, H, W) float32.  weight: (Cout, kH, kW).  bias: (Cout,)|None."""
    B, Cin, H, W = x.shape
    Cout = weight.shape[0]

    xc = jnp.fft.fftn(x, axes=(-2, -1)) if pre_fft else x.astype(jnp.complex64)

    if padding is not None:
        ph, pw = padding if isinstance(padding, tuple) else (padding, padding)
        xc = jnp.pad(xc, ((0, 0), (0, 0), (ph, ph), (pw, pw)))
    _, _, Hp, Wp = xc.shape
    assert weight.shape == (Cout, Hp, Wp), "kernel_size must match (padded) spatial size"

    mix = (Cout != Cin)            # corresponds to `self.one is not None`
    HW = Hp * Wp
    HW2 = 2 * HW                   # interleaved [re, im] lane count

    # ---- interleaved f32 view of the spectrum: one fused pass, no padding ----
    xf = _to_interleaved_f32(xc).reshape(B, Cin, HW2)

    # ---- precompute 1/(weight+eps) and the bias plane once (batch-free) ----
    inv = 1.0 / (weight.astype(jnp.float32).reshape(Cout, HW) + eps)
    inv2 = jnp.repeat(inv, 2, axis=-1)                       # [i, i] per (re, im) pair
    b_vec = (bias if bias is not None
             else jnp.zeros((Cout,), jnp.float32)).astype(jnp.float32)
    bias2 = jnp.stack(
        [jnp.broadcast_to(b_vec[:, None], (Cout, HW)),       # real lanes: + bias
         jnp.zeros((Cout, HW), jnp.float32)],                # imag lanes: + 0
        axis=-1).reshape(Cout, HW2)

    # ---- generation-aware tiling ----
    vmem_limit = _vmem_limit_bytes()
    budget = (3 * vmem_limit) // 4          # leave headroom for double buffering etc.
    # double-buffered bytes per lane for Bblk=1: 2 * 4B * (x + out + inv + bias)
    per_lane_1 = 8 * (Cin + 3 * Cout)
    if HW2 * per_lane_1 <= budget:
        tile = HW2                          # whole spectrum per step (full last dim OK)
    else:
        tile = max(128, (budget // per_lane_1) // 128 * 128)   # lane-dense, 128-aligned
    n_hw = pl.cdiv(HW2, tile)

    bblk = 1
    if n_hw == 1:                           # small spectra: block batch to cut grid steps
        for d in range(B, 0, -1):
            if B % d == 0 and 8 * tile * (d * (Cin + Cout) + 2 * Cout) <= budget:
                bblk = d
                break
    n_b = B // bblk

    x_spec = pl.BlockSpec((bblk, Cin, tile), lambda h, ib: (ib, 0, h))
    out_spec = pl.BlockSpec((bblk, Cout, tile), lambda h, ib: (ib, 0, h))
    w_spec = pl.BlockSpec((Cout, tile), lambda h, ib: (0, h))   # constant over inner b

    out_f = pl.pallas_call(
        partial(_fourier_deconv_kernel, bool(mix)),
        out_shape=jax.ShapeDtypeStruct((B, Cout, HW2), jnp.float32),
        # batch innermost: inv/bias block indices constant on consecutive steps
        grid=(n_hw, n_b),
        in_specs=[x_spec, w_spec, w_spec],
        out_specs=out_spec,
        compiler_params=pltpu.CompilerParams(
            dimension_semantics=("parallel", "parallel"),
            vmem_limit_bytes=vmem_limit,
        ),
    )(xf, inv2, bias2)

    out = _from_interleaved_f32(out_f).reshape(B, Cout, Hp, Wp)
    if post_ifft:
        out = jnp.fft.ifftn(out, axes=(-2, -1))
    return out


# ---------------------------------------------------------------------------
# Pure-JAX reference for validation.
# ---------------------------------------------------------------------------
def _reference(x, weight, bias, eps):
    xc = jnp.fft.fftn(x, axes=(-2, -1))
    B, Cin, H, W = x.shape
    Cout = weight.shape[0]
    if Cout != Cin:
        xc = jnp.broadcast_to(jnp.sum(xc, axis=1, keepdims=True), (B, Cout, H, W))
    denom = weight[None].astype(jnp.float32) + eps
    out_r = jnp.real(xc).astype(jnp.float32) / denom + bias[None, :, None, None]
    out_i = jnp.imag(xc).astype(jnp.float32) / denom
    return out_r + 1j * out_i


if __name__ == "__main__":
    B, Cin, Cout, H, W = 2, 4, 8, 16, 16      # kernel_size = (16, 16), padding=None
    eps = 1e-5

    key = jax.random.PRNGKey(0)
    kw, kb, kx = jax.random.split(key, 3)

    # Deterministic init mirroring torch kaiming_uniform_(a=sqrt(5)) on a
    # (Cout, kH, kW) tensor: fan_in = kH * kW, bound = 1/sqrt(fan_in).
    fan_in = H * W
    bound_w = 1.0 / math.sqrt(fan_in)
    weight = jax.random.uniform(kw, (Cout, H, W), jnp.float32, -bound_w, bound_w)
    bound_b = 1.0 / math.sqrt(fan_in)
    bias = jax.random.uniform(kb, (Cout,), jnp.float32, -bound_b, bound_b)

    x = jax.random.normal(kx, (B, Cin, H, W), jnp.float32)

    out = fourier_deconv2d(x, weight, bias, eps=eps, padding=None,
                           pre_fft=True, post_ifft=False)
    out = jax.block_until_ready(out)

    ref = _reference(x, weight, bias, eps)
    assert out.shape == (B, Cout, H, W) and out.dtype == jnp.complex64
    assert jnp.allclose(jnp.real(out), jnp.real(ref), rtol=1e-3, atol=1e-3)
    assert jnp.allclose(jnp.imag(out), jnp.imag(ref), rtol=1e-3, atol=1e-3)

    print("KERNEL_OK")
</pallas_src>

<mosaic_0001>
module attributes {stable_mosaic.version = 11 : i64} {
  func.func @_fourier_deconv_kernel(%arg0: i32, %arg1: i32, %arg2: memref<2x4x512xf32, #tpu.memory_space<vmem>>, %arg3: memref<8x512xf32, #tpu.memory_space<vmem>>, %arg4: memref<8x512xf32, #tpu.memory_space<vmem>>, %arg5: memref<2x8x512xf32, #tpu.memory_space<vmem>>) attributes {dimension_semantics = [#tpu.dimension_semantics<parallel>, #tpu.dimension_semantics<parallel>], iteration_bounds = array<i64: 1, 1>, scalar_prefetch = 0 : i64, scratch_operands = 0 : i64, tpu.core_type = #tpu.core_type<tc>, window_params = [{transform_indices = @transform_0, window_bounds = array<i64: 2, 4, 512>}, {transform_indices = @transform_1, window_bounds = array<i64: 8, 512>}, {transform_indices = @transform_2, window_bounds = array<i64: 8, 512>}, {transform_indices = @transform_3, window_bounds = array<i64: 2, 8, 512>}]} {
    %c0 = arith.constant 0 : index
    %c0_0 = arith.constant 0 : index
    %c0_1 = arith.constant 0 : index
    %0 = vector.load %arg2[%c0, %c0_0, %c0_1] : memref<2x4x512xf32, #tpu.memory_space<vmem>>, vector<2x4x512xf32>
    %cst = arith.constant dense<0.000000e+00> : vector<2x512xf32>
    %1 = vector.multi_reduction <add>, %0, %cst [1] : vector<2x4x512xf32> to vector<2x512xf32>
    %2 = vector.shape_cast %1 : vector<2x512xf32> to vector<2x1x512xf32>
    %c0_2 = arith.constant 0 : index
    %c0_3 = arith.constant 0 : index
    %3 = vector.load %arg3[%c0_2, %c0_3] : memref<8x512xf32, #tpu.memory_space<vmem>>, vector<8x512xf32>
    %4 = vector.shape_cast %3 : vector<8x512xf32> to vector<1x8x512xf32>
    %5 = vector.broadcast %2 : vector<2x1x512xf32> to vector<2x8x512xf32>
    %6 = vector.broadcast %4 : vector<1x8x512xf32> to vector<2x8x512xf32>
    %7 = arith.mulf %5, %6 : vector<2x8x512xf32>
    %c0_4 = arith.constant 0 : index
    %c0_5 = arith.constant 0 : index
    %8 = vector.load %arg4[%c0_4, %c0_5] : memref<8x512xf32, #tpu.memory_space<vmem>>, vector<8x512xf32>
    %9 = vector.shape_cast %8 : vector<8x512xf32> to vector<1x8x512xf32>
    %10 = vector.broadcast %9 : vector<1x8x512xf32> to vector<2x8x512xf32>
    %11 = arith.addf %7, %10 : vector<2x8x512xf32>
    %c0_6 = arith.constant 0 : index
    %c0_7 = arith.constant 0 : index
    %c0_8 = arith.constant 0 : index
    %12 = vector.load %arg5[%c0_6, %c0_7, %c0_8] : memref<2x8x512xf32, #tpu.memory_space<vmem>>, vector<2x8x512xf32>
    tpu.vector_store %arg5[%c0_6, %c0_7, %c0_8], %11 {strides = array<i32>} : memref<2x8x512xf32, #tpu.memory_space<vmem>>, vector<2x8x512xf32>,
    return
  }
  func.func @transform_0(%arg0: i32, %arg1: i32) -> (i32, i32, i32) {
    %c0_i32 = arith.constant 0 : i32
    %c0_i32_0 = arith.constant 0 : i32
    return %arg1, %c0_i32, %arg0 : i32, i32, i32
  }
  func.func @transform_1(%arg0: i32, %arg1: i32) -> (i32, i32) {
    %c0_i32 = arith.constant 0 : i32
    %c0_i32_0 = arith.constant 0 : i32
    return %c0_i32, %arg0 : i32, i32
  }
  func.func @transform_2(%arg0: i32, %arg1: i32) -> (i32, i32) {
    %c0_i32 = arith.constant 0 : i32
    %c0_i32_0 = arith.constant 0 : i32
    return %c0_i32, %arg0 : i32, i32
  }
  func.func @transform_3(%arg0: i32, %arg1: i32) -> (i32, i32, i32) {
    %c0_i32 = arith.constant 0 : i32
    %c0_i32_0 = arith.constant 0 : i32
    return %arg1, %c0_i32, %arg0 : i32, i32, i32
  }
}

</mosaic_0001>

<llo_original>
// kernel: tpu_custom_call.1
$region0: #{tpu_custom_call.1}
  #allocation0 [shape = 'u32[]', space=smem, size = 0x4, offset = 0x4, fixed_abs, tag = 'smem constant byte address 0x4 - core index']
  #allocation1 [shape = 'u32[72,128]{1,0:T(1,128)}', space=vmem, size = 0x9000, scoped, tag = 'internal scratch']
  %s0 = inlined_call_operand.hbm [shape: f32[2,4,512], index: 0, kind: input, shape index: {}]
  %s1 = inlined_call_operand.hbm [shape: f32[8,512], index: 1, kind: input, shape index: {}]
  %s2 = inlined_call_operand.hbm [shape: f32[8,512], index: 2, kind: input, shape index: {}]
  %s3 = inlined_call_operand.hbm [shape: f32[2,8,512], index: 3, kind: output, shape index: {}]
  %s4 = sld [smem:[#allocation0]]
  $region34: #{tpu_custom_call.1} parent=0
    _
  %s6 = ssub.s32 1, %s4
  %s7 = scalar_select 0, %s6, %s4
  $region1: #{tpu_custom_call.1} parent=0
    #allocation2 [shape = 'u8[16384]{0}', space=vmem, size = 0x4000, scoped, tag = 'input window, operand 0, single buffered']
    #allocation3 [shape = 's32[1]{0}', space=sflag, size = 0x4, scoped, tag = 'scoped memory for tpu_custom_call.1']
    #allocation4 [shape = 's32[1]{0}', space=sflag, size = 0x4, scoped, tag = 'scoped memory for tpu_custom_call.1']
    #allocation5 [shape = 'u8[16384]{0}', space=vmem, size = 0x4000, scoped, tag = 'input window, operand 1, single buffered']
    #allocation6 [shape = 's32[1]{0}', space=sflag, size = 0x4, scoped, tag = 'scoped memory for tpu_custom_call.1']
    #allocation7 [shape = 'u8[16384]{0}', space=vmem, size = 0x4000, scoped, tag = 'input window, operand 2, single buffered']
    #allocation8 [shape = 'u8[32768]{0}', space=vmem, size = 0x8000, scoped, tag = 'output window, operand 0, single buffered']
    %8 = vsyncpa [#allocation3], 0
    %9 = vsyncpa [#allocation6], 0
    %10 = vsyncpa [#allocation4], 0
    // Predicated region
    $region2: #{tpu_custom_call.1} parent=1 // pred_check
      _
    $region3: #{tpu_custom_call.1} parent=1 // pred_check_branch
      %12 = sbr.rel (0) target = $region5
    $region4: #{tpu_custom_call.1} parent=1 // pred_region
      %14 = vsyncadd [#allocation3], 0
      %s15 = sshll.u32 %s0, 4
      %s16 = int_to_ptr.hbm [resolvable:$true] %s15
      %s17 = sshll.u32 [#allocation2], 4
      %s18 = int_to_ptr.vmem [resolvable:$true] %s17
      %23 = dma.hbm_to_vmem [thread:$0]  %s16, 512, %s18, [#allocation3], 256, 256, 16
    $region5: #{tpu_custom_call.1} parent=1 // pred_fallthru
      _
    // Predicated region
    $region6: #{tpu_custom_call.1} parent=1 // pred_check
      _
    $region7: #{tpu_custom_call.1} parent=1 // pred_check_branch
      %25 = sbr.rel (0) target = $region9
    $region8: #{tpu_custom_call.1} parent=1 // pred_region
      %27 = vsyncadd [#allocation6], 0
      %s29 = sshll.u32 %s1, 4
      %s30 = int_to_ptr.hbm [resolvable:$true] %s29
      %s31 = sshll.u32 [#allocation5], 4
      %s32 = int_to_ptr.vmem [resolvable:$true] %s31
      %34 = dma.hbm_to_vmem [thread:$0]  %s30, 512, %s32, [#allocation6]
    $region9: #{tpu_custom_call.1} parent=1 // pred_fallthru
      _
    // Predicated region
    $region10: #{tpu_custom_call.1} parent=1 // pred_check
      _
    $region11: #{tpu_custom_call.1} parent=1 // pred_check_branch
      %36 = sbr.rel (0) target = $region13
    $region12: #{tpu_custom_call.1} parent=1 // pred_region
      %38 = vsyncadd [#allocation6], 0
      %s40 = sshll.u32 %s2, 4
      %s41 = int_to_ptr.hbm [resolvable:$true] %s40
      %s42 = sshll.u32 [#allocation7], 4
      %s43 = int_to_ptr.vmem [resolvable:$true] %s42
      %45 = dma.hbm_to_vmem [thread:$0]  %s41, 512, %s43, [#allocation6]
    $region13: #{tpu_custom_call.1} parent=1 // pred_fallthru
      _
    // Predicated region
    $region14: #{tpu_custom_call.1} parent=1 // pred_check
      _
    $region15: #{tpu_custom_call.1} parent=1 // pred_check_branch
      %47 = sbr.rel (0) target = $region17
    $region16: #{tpu_custom_call.1} parent=1 // pred_region
      %49 = dma.done [#allocation3], 512
    $region17: #{tpu_custom_call.1} parent=1 // pred_fallthru
      _
    // Predicated region
    $region18: #{tpu_custom_call.1} parent=1 // pred_check
      _
    $region19: #{tpu_custom_call.1} parent=1 // pred_check_branch
      %51 = sbr.rel (0) target = $region21
    $region20: #{tpu_custom_call.1} parent=1 // pred_region
      %53 = dma.done [#allocation6], 512
    $region21: #{tpu_custom_call.1} parent=1 // pred_fallthru
      _
    // Predicated region
    $region22: #{tpu_custom_call.1} parent=1 // pred_check
      _
    $region23: #{tpu_custom_call.1} parent=1 // pred_check_branch
      %55 = sbr.rel (0) target = $region25
    $region24: #{tpu_custom_call.1} parent=1 // pred_region
      %57 = dma.done [#allocation6], 512
    $region25: #{tpu_custom_call.1} parent=1 // pred_fallthru
      _
    %v58 = vld [vmem:[#allocation2] sm:$0xff]
    %v59 = vld [vmem:[#allocation2 + $0x8] sm:$0xff]
    %v60 = vld [vmem:[#allocation2 + $0x10] sm:$0xff]
    %v61 = vld [vmem:[#allocation2 + $0x18] sm:$0xff]
    %66 = vst [vmem:[#allocation1] ss:$2 sm:$0xff] %v58
    %s67 = scalar_lea.vmem [#allocation1], 16
    %68 = vst [vmem:[%s67] ss:$2 sm:$0xff] %v59
    %v69 = vld.sshfl [vmem:[#allocation1] sm:$0xff pattern:$0x75316420]
    %v70 = vld.sshfl [vmem:[#allocation1 + $0x8] sm:$0xff pattern:$0x75316420]
    %v71 = vld.sshfl [vmem:[#allocation1 + $0x10] sm:$0xff pattern:$0x75316420]
    %v72 = vld.sshfl [vmem:[#allocation1 + $0x18] sm:$0xff pattern:$0x75316420]
    %s73 = scalar_lea.vmem [#allocation1], 32
    %74 = vst [vmem:[%s73] ss:$2 sm:$0xff] %v60
    %s75 = scalar_lea.vmem [#allocation1], 48
    %76 = vst [vmem:[%s75] ss:$2 sm:$0xff] %v61
    %v77 = vld.sshfl [vmem:[#allocation1 + $0x20] sm:$0xff pattern:$0x75316420]
    %v78 = vld.sshfl [vmem:[#allocation1 + $0x28] sm:$0xff pattern:$0x75316420]
    %v79 = vld.sshfl [vmem:[#allocation1 + $0x30] sm:$0xff pattern:$0x75316420]
    %v80 = vld.sshfl [vmem:[#allocation1 + $0x38] sm:$0xff pattern:$0x75316420]
    %vm89 = vcmask 1043456
    %v90 = vsel %vm89, %v69, 0.0
    %v91 = vrot.slane %v90, 4
    %v92 = vadd.f32 %v90, %v91
    %v93 = vrot.slane %v92, 2
    %v94 = vadd.f32 %v92, %v93
    %v95 = vrot.slane %v94, 1
    %v96 = vadd.f32 %v94, %v95
    %v97 = vsel %vm89, %v70, 0.0
    %v98 = vrot.slane %v97, 4
    %v99 = vadd.f32 %v97, %v98
    %v100 = vrot.slane %v99, 2
    %v101 = vadd.f32 %v99, %v100
    %v102 = vrot.slane %v101, 1
    %v103 = vadd.f32 %v101, %v102
    %v104 = vsel %vm89, %v71, 0.0
    %v105 = vrot.slane %v104, 4
    %v106 = vadd.f32 %v104, %v105
    %v107 = vrot.slane %v106, 2
    %v108 = vadd.f32 %v106, %v107
    %v109 = vrot.slane %v108, 1
    %v110 = vadd.f32 %v108, %v109
    %v111 = vsel %vm89, %v72, 0.0
    %v112 = vrot.slane %v111, 4
    %v113 = vadd.f32 %v111, %v112
    %v114 = vrot.slane %v113, 2
    %v115 = vadd.f32 %v113, %v114
    %v116 = vrot.slane %v115, 1
    %v117 = vadd.f32 %v115, %v116
    %v118 = vsel %vm89, %v77, 0.0
    %v119 = vrot.slane %v118, 4
    %v120 = vadd.f32 %v118, %v119
    %v121 = vrot.slane %v120, 2
    %v122 = vadd.f32 %v120, %v121
    %v123 = vrot.slane %v122, 1
    %v124 = vadd.f32 %v122, %v123
    %v125 = vsel %vm89, %v78, 0.0
    %v126 = vrot.slane %v125, 4
    %v127 = vadd.f32 %v125, %v126
    %v128 = vrot.slane %v127, 2
    %v129 = vadd.f32 %v127, %v128
    %v130 = vrot.slane %v129, 1
    %v131 = vadd.f32 %v129, %v130
    %v132 = vsel %vm89, %v79, 0.0
    %v133 = vrot.slane %v132, 4
    %v134 = vadd.f32 %v132, %v133
    %v135 = vrot.slane %v134, 2
    %v136 = vadd.f32 %v134, %v135
    %v137 = vrot.slane %v136, 1
    %v138 = vadd.f32 %v136, %v137
    %v139 = vsel %vm89, %v80, 0.0
    %v140 = vrot.slane %v139, 4
    %v141 = vadd.f32 %v139, %v140
    %v142 = vrot.slane %v141, 2
    %v143 = vadd.f32 %v141, %v142
    %v144 = vrot.slane %v143, 1
    %v145 = vadd.f32 %v143, %v144
    %v146 = vld [vmem:[#allocation5] sm:$0xff]
    %v147 = vld [vmem:[#allocation5 + $0x8] sm:$0xff]
    %v148 = vld [vmem:[#allocation5 + $0x10] sm:$0xff]
    %v149 = vld [vmem:[#allocation5 + $0x18] sm:$0xff]
    %v150 = vmul.f32 %v96, %v146
    %v151 = vmul.f32 %v103, %v147
    %v152 = vmul.f32 %v110, %v148
    %v153 = vmul.f32 %v117, %v149
    %v154 = vmul.f32 %v124, %v146
    %v155 = vmul.f32 %v131, %v147
    %v156 = vmul.f32 %v138, %v148
    %v157 = vmul.f32 %v145, %v149
    %v158 = vld [vmem:[#allocation7] sm:$0xff]
    %v159 = vld [vmem:[#allocation7 + $0x8] sm:$0xff]
    %v160 = vld [vmem:[#allocation7 + $0x10] sm:$0xff]
    %v161 = vld [vmem:[#allocation7 + $0x18] sm:$0xff]
    %v162 = vadd.f32 %v150, %v158
    %v163 = vadd.f32 %v151, %v159
    %v164 = vadd.f32 %v152, %v160
    %v165 = vadd.f32 %v153, %v161
    %v166 = vadd.f32 %v154, %v158
    %v167 = vadd.f32 %v155, %v159
    %v168 = vadd.f32 %v156, %v160
    %v169 = vadd.f32 %v157, %v161
    %170 = vst [vmem:[#allocation8] sm:$0xff] %v162
    %171 = vst [vmem:[#allocation8 + $0x8] sm:$0xff] %v163
    %172 = vst [vmem:[#allocation8 + $0x10] sm:$0xff] %v164
    %173 = vst [vmem:[#allocation8 + $0x18] sm:$0xff] %v165
    %174 = vst [vmem:[#allocation8 + $0x20] sm:$0xff] %v166
    %175 = vst [vmem:[#allocation8 + $0x28] sm:$0xff] %v167
    %176 = vst [vmem:[#allocation8 + $0x30] sm:$0xff] %v168
    %177 = vst [vmem:[#allocation8 + $0x38] sm:$0xff] %v169
    // Predicated region
    $region26: #{tpu_custom_call.1} parent=1 // pred_check
      _
    $region27: #{tpu_custom_call.1} parent=1 // pred_check_branch
      %179 = sbr.rel (0) target = $region29
    $region28: #{tpu_custom_call.1} parent=1 // pred_region
      %181 = vsyncadd [#allocation4], 0
      %s182 = sshll.u32 [#allocation8], 4
      %s183 = int_to_ptr.vmem [resolvable:$true] %s182
      %s184 = sshll.u32 %s3, 4
      %s185 = int_to_ptr.hbm [resolvable:$true] %s184
      %190 = dma.vmem_to_hbm [thread:$0]  %s183, 1024, %s185, [#allocation4], 512, 512, 32
    $region29: #{tpu_custom_call.1} parent=1 // pred_fallthru
      _
    // Predicated region
    $region30: #{tpu_custom_call.1} parent=1 // pred_check
      _
    $region31: #{tpu_custom_call.1} parent=1 // pred_check_branch
      %192 = sbr.rel (0) target = $region33
    $region32: #{tpu_custom_call.1} parent=1 // pred_region
      %194 = dma.done [#allocation4], 1024
    $region33: #{tpu_custom_call.1} parent=1 // pred_fallthru
      _
    %195 = vsyncpa [#allocation3], 1
    %196 = vsyncpa [#allocation6], 1
    %197 = vsyncpa [#allocation4], 1

</llo_original>
